<compile_context>
chip_gen: v6e
topology: v6e:2x2x1
jax: 0.10.0
libtpu: 0.0.40
codegen_flags: <defaults>
</compile_context>

<pallas_src>
import functools

import jax
import jax.numpy as jnp
from jax import lax
from jax.experimental import pallas as pl
from jax.experimental.pallas import tpu as pltpu


def _dropout_logit_kernel(seed_ref, x_ref, o_ref, *, drop_threshold, mask_scale):
    block_rows, lanes = x_ref.shape

    # Global element index of every value in this block (hash counter).
    row_ids = lax.broadcasted_iota(jnp.int32, (block_rows, lanes), 0)
    col_ids = lax.broadcasted_iota(jnp.int32, (block_rows, lanes), 1)
    base_row = pl.program_id(0) * block_rows
    counter = ((base_row + row_ids) * lanes + col_ids).astype(jnp.uint32)

    # Counter-based PRNG: seed-offset + lowbias32 avalanche hash (pure VPU ops,
    # portable across TPU codegen and interpret mode).
    v = counter + seed_ref[0].astype(jnp.uint32) * jnp.uint32(0x9E3779B9)
    v = v ^ (v >> 16)
    v = v * jnp.uint32(0x7FEB352D)
    v = v ^ (v >> 15)
    v = v * jnp.uint32(0x846CA68B)
    v = v ^ (v >> 16)

    # floor(drop_prob + u) == 1  <=>  u >= 1 - drop_prob  <=>  bits >= threshold.
    x = x_ref[...]
    drop = v >= jnp.uint32(drop_threshold)
    ms = jnp.array(mask_scale, dtype=x.dtype)
    zero = jnp.array(0, dtype=x.dtype)
    o_ref[...] = x - jnp.where(drop, ms, zero)


def dropout_logit(x, drop_prob, seed=0, training=True):
    """Pallas TPU implementation of DropOutLogit.forward."""
    if drop_prob is None or drop_prob == 0.0 or not training:
        return x

    mask_scale = 1e8 if x.dtype == jnp.float32 else 1e4
    # Drop with probability drop_prob: u32 bits >= (1 - p) * 2^32.
    drop_threshold = int(round((1.0 - float(drop_prob)) * 4294967296.0))
    drop_threshold = max(0, min(drop_threshold, 4294967295))

    orig_shape = x.shape
    flat = x.reshape(-1)
    n = flat.shape[0]

    # Lane-dense 2-D view; avoid wrapper-side padding whenever possible.
    width = None
    for cand in (1024, 512, 256, 128):
        if n % cand == 0:
            width = cand
            break
    if width is None:
        # Ragged fallback (not hit for typical NCHW logits).
        width = 1024
        padded_n = pl.cdiv(n, width) * width
        flat = jnp.pad(flat, (0, padded_n - n))
    else:
        padded_n = n

    rows = padded_n // width
    x2d = flat.reshape(rows, width)

    # ~1 MiB per input tile => ~4 MiB live with double-buffered in+out,
    # comfortably inside v5e's 16 MiB default scoped VMEM and v7x's 64 MiB.
    itemsize = jnp.dtype(x.dtype).itemsize
    target_rows = max(1, (1 << 20) // (width * itemsize))
    block_rows = max(8, (target_rows // 8) * 8)
    block_rows = min(block_rows, rows)  # == rows (full dim) for tiny inputs

    grid = (pl.cdiv(rows, block_rows),)

    seed_arr = jnp.asarray([seed], dtype=jnp.int32)

    kernel = functools.partial(
        _dropout_logit_kernel,
        drop_threshold=drop_threshold,
        mask_scale=mask_scale,
    )

    out2d = pl.pallas_call(
        kernel,
        out_shape=jax.ShapeDtypeStruct((rows, width), x.dtype),
        grid_spec=pltpu.PrefetchScalarGridSpec(
            num_scalar_prefetch=0,
            grid=grid,
            in_specs=[
                pl.BlockSpec(memory_space=pltpu.SMEM),            # seed scalar
                pl.BlockSpec((block_rows, width), lambda i: (i, 0)),
            ],
            out_specs=pl.BlockSpec((block_rows, width), lambda i: (i, 0)),
        ),
        compiler_params=pltpu.CompilerParams(
            dimension_semantics=("parallel",),  # shard blocks across TCs (v7x)
        ),
        cost_estimate=pl.CostEstimate(
            flops=2 * padded_n,
            transcendentals=0,
            bytes_accessed=2 * padded_n * itemsize,
        ),
    )(seed_arr, x2d)

    if padded_n != n:
        return out2d.reshape(-1)[:n].reshape(orig_shape)
    return out2d.reshape(orig_shape)


if __name__ == "__main__":
    key = jax.random.PRNGKey(0)
    # Small NCHW logits tensor, consistent with conv-feature usage.
    x = jax.random.normal(key, (2, 4, 16, 16), dtype=jnp.float32)
    drop_prob = 0.1

    out = dropout_logit(x, drop_prob, seed=0, training=True)
    out = jax.block_until_ready(out)

    # Basic sanity: output is either x (kept) or x - 1e8 (dropped).
    diff = x - out
    is_kept = jnp.isclose(diff, 0.0)
    is_dropped = jnp.isclose(diff, 1e8)
    assert bool(jnp.all(is_kept | is_dropped))
    drop_frac = float(jnp.mean(is_dropped.astype(jnp.float32)))
    assert 0.0 < drop_frac < 0.5  # loose check around drop_prob=0.1

    # Eval mode / drop_prob == 0 -> identity.
    out_eval = dropout_logit(x, drop_prob, training=False)
    assert bool(jnp.all(out_eval == x))
    out_zero = dropout_logit(x, 0.0, training=True)
    assert bool(jnp.all(out_zero == x))

    print("KERNEL_OK")
</pallas_src>

<mosaic_0001>
module attributes {stable_mosaic.version = 11 : i64} {
  func.func @_dropout_logit_kernel(%arg0: i32, %arg1: memref<1xi32, #tpu.memory_space<smem>>, %arg2: memref<2x1024xf32, #tpu.memory_space<vmem>>, %arg3: memref<2x1024xf32, #tpu.memory_space<vmem>>) attributes {dimension_semantics = [#tpu.dimension_semantics<parallel>], iteration_bounds = array<i64: 1>, scalar_prefetch = 0 : i64, scratch_operands = 0 : i64, tpu.core_type = #tpu.core_type<tc>, window_params = [{transform_indices = @transform_0, window_bounds = array<i64: 1>}, {transform_indices = @transform_1, window_bounds = array<i64: 2, 1024>}, {transform_indices = @transform_2, window_bounds = array<i64: 2, 1024>}]} {
    %0 = tpu.iota {dimensions = array<i32: 0>} : vector<2x1024xi32>
    %1 = tpu.iota {dimensions = array<i32: 1>} : vector<2x1024xi32>
    %c2_i32 = arith.constant 2 : i32
    %2 = arith.muli %arg0, %c2_i32 : i32
    %3 = vector.broadcast %2 : i32 to vector<2x1024xi32>
    %4 = arith.addi %3, %0 : vector<2x1024xi32>
    %c1024_i32 = arith.constant 1024 : i32
    %5 = vector.broadcast %c1024_i32 : i32 to vector<2x1024xi32>
    %6 = arith.muli %4, %5 : vector<2x1024xi32>
    %7 = arith.addi %6, %1 : vector<2x1024xi32>
    %c0 = arith.constant 0 : index
    %8 = memref.load %arg1[%c0] : memref<1xi32, #tpu.memory_space<smem>>
    %c-1640531527_i32 = arith.constant -1640531527 : i32
    %9 = arith.muli %8, %c-1640531527_i32 : i32
    %10 = vector.broadcast %9 : i32 to vector<2x1024xi32>
    %11 = arith.addi %7, %10 : vector<2x1024xi32>
    %c16_i32 = arith.constant 16 : i32
    %12 = vector.broadcast %c16_i32 : i32 to vector<2x1024xi32>
    %13 = arith.shrui %11, %12 : vector<2x1024xi32>
    %14 = arith.xori %11, %13 : vector<2x1024xi32>
    %c2146121005_i32 = arith.constant 2146121005 : i32
    %15 = vector.broadcast %c2146121005_i32 : i32 to vector<2x1024xi32>
    %16 = arith.muli %14, %15 : vector<2x1024xi32>
    %c15_i32 = arith.constant 15 : i32
    %17 = vector.broadcast %c15_i32 : i32 to vector<2x1024xi32>
    %18 = arith.shrui %16, %17 : vector<2x1024xi32>
    %19 = arith.xori %16, %18 : vector<2x1024xi32>
    %c-2073254261_i32 = arith.constant -2073254261 : i32
    %20 = vector.broadcast %c-2073254261_i32 : i32 to vector<2x1024xi32>
    %21 = arith.muli %19, %20 : vector<2x1024xi32>
    %c16_i32_0 = arith.constant 16 : i32
    %22 = vector.broadcast %c16_i32_0 : i32 to vector<2x1024xi32>
    %23 = arith.shrui %21, %22 : vector<2x1024xi32>
    %24 = arith.xori %21, %23 : vector<2x1024xi32>
    %c0_1 = arith.constant 0 : index
    %c0_2 = arith.constant 0 : index
    %25 = vector.load %arg2[%c0_1, %c0_2] : memref<2x1024xf32, #tpu.memory_space<vmem>>, vector<2x1024xf32>
    %c-429496730_i32 = arith.constant -429496730 : i32
    %26 = vector.broadcast %c-429496730_i32 : i32 to vector<2x1024xi32>
    %27 = arith.cmpi uge, %24, %26 : vector<2x1024xi32>
    %cst = arith.constant 1.000000e+08 : f32
    %cst_3 = arith.constant 0.000000e+00 : f32
    %28 = vector.broadcast %cst : f32 to vector<2x1024xf32>
    %29 = vector.broadcast %cst_3 : f32 to vector<2x1024xf32>
    %30 = arith.select %27, %28, %29 : vector<2x1024xi1>, vector<2x1024xf32>
    %31 = arith.subf %25, %30 : vector<2x1024xf32>
    %c0_4 = arith.constant 0 : index
    %c0_5 = arith.constant 0 : index
    %32 = vector.load %arg3[%c0_4, %c0_5] : memref<2x1024xf32, #tpu.memory_space<vmem>>, vector<2x1024xf32>
    tpu.vector_store %arg3[%c0_4, %c0_5], %31 {strides = array<i32>} : memref<2x1024xf32, #tpu.memory_space<vmem>>, vector<2x1024xf32>,
    return
  }
  func.func @transform_0(%arg0: i32) -> i32 {
    %c0_i32 = arith.constant 0 : i32
    %c0_i32_0 = arith.constant 0 : i32
    return %c0_i32 : i32
  }
  func.func @transform_1(%arg0: i32) -> (i32, i32) {
    %c0_i32 = arith.constant 0 : i32
    %c0_i32_0 = arith.constant 0 : i32
    return %arg0, %c0_i32 : i32, i32
  }
  func.func @transform_2(%arg0: i32) -> (i32, i32) {
    %c0_i32 = arith.constant 0 : i32
    %c0_i32_0 = arith.constant 0 : i32
    return %arg0, %c0_i32 : i32, i32
  }
}

</mosaic_0001>

<llo_original>
// kernel: tpu_custom_call.1
$region0: #{tpu_custom_call.1}
  #allocation0 [shape = 'u32[]', space=smem, size = 0x4, offset = 0x4, fixed_abs, tag = 'smem constant byte address 0x4 - core index']
  #allocation1 [shape = 'u32[144,128]{1,0:T(1,128)}', space=vmem, size = 0x12000, scoped, tag = 'internal scratch']
  #allocation2 [shape = 's32[1]{0:T(128)S(6)}', space=smem, size = 0x200, scoped, tag = 'scoped memory for tpu_custom_call.1']
  %s0 = inlined_call_operand.<no memory space> [shape: s32[1], index: 0, kind: input, shape index: {}]
  %s1 = inlined_call_operand.hbm [shape: f32[2,1024], index: 1, kind: input, shape index: {}]
  %s2 = inlined_call_operand.hbm [shape: f32[2,1024], index: 2, kind: output, shape index: {}]
  %s3 = sld [smem:[#allocation0]]
  $region22: #{tpu_custom_call.1} parent=0
    _
  %s5 = ssub.s32 1, %s3
  %s6 = scalar_select 0, %s5, %s3
  %7 = sst [smem:[#allocation2]] %s0
  $region1: #{tpu_custom_call.1} parent=0
    #allocation3 [shape = 'u8[8192]{0}', space=vmem, size = 0x2000, scoped, tag = 'input window, operand 1, single buffered']
    #allocation4 [shape = 's32[1]{0}', space=sflag, size = 0x4, scoped, tag = 'scoped memory for tpu_custom_call.1']
    #allocation5 [shape = 's32[1]{0}', space=sflag, size = 0x4, scoped, tag = 'scoped memory for tpu_custom_call.1']
    #allocation6 [shape = 'u8[8192]{0}', space=vmem, size = 0x2000, scoped, tag = 'output window, operand 0, single buffered']
    %8 = vsyncpa [#allocation4], 0
    %9 = vsyncpa [#allocation5], 0
    // Predicated region
    $region2: #{tpu_custom_call.1} parent=1 // pred_check
      _
    $region3: #{tpu_custom_call.1} parent=1 // pred_check_branch
      %11 = sbr.rel (0) target = $region5
    $region4: #{tpu_custom_call.1} parent=1 // pred_region
      _
    $region5: #{tpu_custom_call.1} parent=1 // pred_fallthru
      _
    // Predicated region
    $region6: #{tpu_custom_call.1} parent=1 // pred_check
      _
    $region7: #{tpu_custom_call.1} parent=1 // pred_check_branch
      %13 = sbr.rel (0) target = $region9
    $region8: #{tpu_custom_call.1} parent=1 // pred_region
      %s15 = ssub.s32 256, 256
      %16 = vsyncadd [#allocation4], %s15
      %s18 = sshll.u32 [#allocation3], 4
      %s19 = int_to_ptr.vmem [resolvable:$true] %s18
      %21 = dma.hbm_to_vmem [thread:$0]  %s1, 256, %s19, [#allocation4]
    $region9: #{tpu_custom_call.1} parent=1 // pred_fallthru
      _
    // Predicated region
    $region10: #{tpu_custom_call.1} parent=1 // pred_check
      _
    $region11: #{tpu_custom_call.1} parent=1 // pred_check_branch
      %23 = sbr.rel (0) target = $region13
    $region12: #{tpu_custom_call.1} parent=1 // pred_region
      %24 = dma.done [#allocation4], 256
    $region13: #{tpu_custom_call.1} parent=1 // pred_fallthru
      _
    %v25 = vlaneseq
    %v26 = vshrl.u32 %v25, 7
    %v27 = vlaneseq
    %v28 = vand.u32 %v27, 127
    %v29 = vadd.s32 %v28, 128
    %v30 = vadd.s32 %v28, 256
    %v31 = vadd.s32 %v28, 384
    %v32 = vadd.s32 %v28, 512
    %v33 = vadd.s32 %v28, 640
    %v34 = vadd.s32 %v28, 768
    %v35 = vadd.s32 %v28, 896
    %s36 = smul.u32 0, 2
    %v37 = vstv %s36
    %v38 = vadd.s32 %v37, %v26
    %v39 = vmul.u32 %v38, 1024
    %v40 = vadd.s32 %v39, %v28
    %v41 = vadd.s32 %v39, %v29
    %v42 = vadd.s32 %v39, %v30
    %v43 = vadd.s32 %v39, %v31
    %v44 = vadd.s32 %v39, %v32
    %v45 = vadd.s32 %v39, %v33
    %v46 = vadd.s32 %v39, %v34
    %v47 = vadd.s32 %v39, %v35
    %s48 = sld [smem:[#allocation2]]
    %s49 = smul.u32 %s48, 2654435769
    %v50 = vstv %s49
    %v51 = vadd.s32 %v40, %v50
    %v52 = vadd.s32 %v41, %v50
    %v53 = vadd.s32 %v42, %v50
    %v54 = vadd.s32 %v43, %v50
    %v55 = vadd.s32 %v44, %v50
    %v56 = vadd.s32 %v45, %v50
    %v57 = vadd.s32 %v46, %v50
    %v58 = vadd.s32 %v47, %v50
    %v59 = vshrl.u32 %v51, 16
    %v60 = vshrl.u32 %v52, 16
    %v61 = vshrl.u32 %v53, 16
    %v62 = vshrl.u32 %v54, 16
    %v63 = vshrl.u32 %v55, 16
    %v64 = vshrl.u32 %v56, 16
    %v65 = vshrl.u32 %v57, 16
    %v66 = vshrl.u32 %v58, 16
    %v67 = vxor.u32 %v51, %v59
    %v68 = vxor.u32 %v52, %v60
    %v69 = vxor.u32 %v53, %v61
    %v70 = vxor.u32 %v54, %v62
    %v71 = vxor.u32 %v55, %v63
    %v72 = vxor.u32 %v56, %v64
    %v73 = vxor.u32 %v57, %v65
    %v74 = vxor.u32 %v58, %v66
    %v75 = vmul.u32 %v67, 2146121005
    %v76 = vmul.u32 %v68, 2146121005
    %v77 = vmul.u32 %v69, 2146121005
    %v78 = vmul.u32 %v70, 2146121005
    %v79 = vmul.u32 %v71, 2146121005
    %v80 = vmul.u32 %v72, 2146121005
    %v81 = vmul.u32 %v73, 2146121005
    %v82 = vmul.u32 %v74, 2146121005
    %v83 = vshrl.u32 %v75, 15
    %v84 = vshrl.u32 %v76, 15
    %v85 = vshrl.u32 %v77, 15
    %v86 = vshrl.u32 %v78, 15
    %v87 = vshrl.u32 %v79, 15
    %v88 = vshrl.u32 %v80, 15
    %v89 = vshrl.u32 %v81, 15
    %v90 = vshrl.u32 %v82, 15
    %v91 = vxor.u32 %v75, %v83
    %v92 = vxor.u32 %v76, %v84
    %v93 = vxor.u32 %v77, %v85
    %v94 = vxor.u32 %v78, %v86
    %v95 = vxor.u32 %v79, %v87
    %v96 = vxor.u32 %v80, %v88
    %v97 = vxor.u32 %v81, %v89
    %v98 = vxor.u32 %v82, %v90
    %v99 = vmul.u32 %v91, 2221713035
    %v100 = vmul.u32 %v92, 2221713035
    %v101 = vmul.u32 %v93, 2221713035
    %v102 = vmul.u32 %v94, 2221713035
    %v103 = vmul.u32 %v95, 2221713035
    %v104 = vmul.u32 %v96, 2221713035
    %v105 = vmul.u32 %v97, 2221713035
    %v106 = vmul.u32 %v98, 2221713035
    %v107 = vshrl.u32 %v99, 16
    %v108 = vshrl.u32 %v100, 16
    %v109 = vshrl.u32 %v101, 16
    %v110 = vshrl.u32 %v102, 16
    %v111 = vshrl.u32 %v103, 16
    %v112 = vshrl.u32 %v104, 16
    %v113 = vshrl.u32 %v105, 16
    %v114 = vshrl.u32 %v106, 16
    %v115 = vxor.u32 %v99, %v107
    %v116 = vxor.u32 %v100, %v108
    %v117 = vxor.u32 %v101, %v109
    %v118 = vxor.u32 %v102, %v110
    %v119 = vxor.u32 %v103, %v111
    %v120 = vxor.u32 %v104, %v112
    %v121 = vxor.u32 %v105, %v113
    %v122 = vxor.u32 %v106, %v114
    %v123 = vld [vmem:[#allocation3] sm:$0xff]
    %v124 = vld [vmem:[#allocation3 + $0x8] sm:$0xff]
    %vm125 = vcmp.ge.u32.totalorder %v115, 3865470566
    %vm126 = vcmp.ge.u32.totalorder %v116, 3865470566
    %vm127 = vcmp.ge.u32.totalorder %v117, 3865470566
    %vm128 = vcmp.ge.u32.totalorder %v118, 3865470566
    %vm129 = vcmp.ge.u32.totalorder %v119, 3865470566
    %vm130 = vcmp.ge.u32.totalorder %v120, 3865470566
    %vm131 = vcmp.ge.u32.totalorder %v121, 3865470566
    %vm132 = vcmp.ge.u32.totalorder %v122, 3865470566
    %v133 = vsel %vm125, 1e+08, 0.0
    %v134 = vsel %vm126, 1e+08, 0.0
    %v135 = vsel %vm127, 1e+08, 0.0
    %v136 = vsel %vm128, 1e+08, 0.0
    %v137 = vsel %vm129, 1e+08, 0.0
    %v138 = vsel %vm130, 1e+08, 0.0
    %v139 = vsel %vm131, 1e+08, 0.0
    %v140 = vsel %vm132, 1e+08, 0.0
    %v149 = vcombine.low %v133, %v134
    %v150 = vcombine.low %v135, %v136
    %v152 = vunpack.c.l.s4 1983009808
    %v153 = vunpack.c.0.s8 %v152
    %v154 = vlaneseq
    %v155 = vshrl.u32 %v154, 7
    %v156 = vsub.s32 %v153, %v155
    %v157 = vrot.slane %v149, %v156
    %v159 = vunpack.c.l.s4 1983009808
    %v160 = vunpack.c.0.s8 %v159
    %v161 = vlaneseq
    %v162 = vshrl.u32 %v161, 7
    %v163 = vsub.s32 %v160, %v162
    %v164 = vrot.slane %v150, %v163
    %v165 = vcombine.low %v157, %v164
    %v166 = vcombine.low %v137, %v138
    %v167 = vcombine.low %v139, %v140
    %v169 = vunpack.c.l.s4 1983009808
    %v170 = vunpack.c.0.s8 %v169
    %v171 = vlaneseq
    %v172 = vshrl.u32 %v171, 7
    %v173 = vsub.s32 %v170, %v172
    %v174 = vrot.slane %v166, %v173
    %v176 = vunpack.c.l.s4 1983009808
    %v177 = vunpack.c.0.s8 %v176
    %v178 = vlaneseq
    %v179 = vshrl.u32 %v178, 7
    %v180 = vsub.s32 %v177, %v179
    %v181 = vrot.slane %v167, %v180
    %v182 = vcombine.low %v174, %v181
    %v185 = vsub.f32 %v123, %v165
    %v186 = vsub.f32 %v124, %v182
    %187 = vst [vmem:[#allocation6] sm:$0xff] %v185
    %188 = vst [vmem:[#allocation6 + $0x8] sm:$0xff] %v186
    // Predicated region
    $region14: #{tpu_custom_call.1} parent=1 // pred_check
      _
    $region15: #{tpu_custom_call.1} parent=1 // pred_check_branch
      %190 = sbr.rel (0) target = $region17
    $region16: #{tpu_custom_call.1} parent=1 // pred_region
      %s192 = ssub.s32 256, 256
      %193 = vsyncadd [#allocation5], %s192
      %s195 = sshll.u32 [#allocation6], 4
      %s196 = int_to_ptr.vmem [resolvable:$true] %s195
      %198 = dma.vmem_to_hbm [thread:$0]  %s196, 256, %s2, [#allocation5]
    $region17: #{tpu_custom_call.1} parent=1 // pred_fallthru
      _
    // Predicated region
    $region18: #{tpu_custom_call.1} parent=1 // pred_check
      _
    $region19: #{tpu_custom_call.1} parent=1 // pred_check_branch
      %200 = sbr.rel (0) target = $region21
    $region20: #{tpu_custom_call.1} parent=1 // pred_region
      %201 = dma.done [#allocation5], 256
    $region21: #{tpu_custom_call.1} parent=1 // pred_fallthru
      _
    %202 = vsyncpa [#allocation4], 1
    %203 = vsyncpa [#allocation5], 1

</llo_original>
